<compile_context>
chip_gen: v6e
topology: v6e:2x2x1
jax: 0.10.0
libtpu: 0.0.40
codegen_flags: <defaults>
</compile_context>

<pallas_src>
import jax
import jax.numpy as jnp
from jax.experimental import pallas as pl
from jax.experimental.pallas import tpu as pltpu

BN_EPS = 1e-5


def _round_up(x, m):
    return (x + m - 1) // m * m


# --------------------------- kernels ---------------------------------------

def _conv1x1_bn_relu_kernel_single_k(w_ref, x_ref, shift_ref, o_ref):
    # w_ref:     (tile_co, Cin)     BN-scale-folded 1x1 weight (bf16)
    # x_ref:     (Cin, tile_s)      channels x pixels tile of one image
    # shift_ref: (tile_co, 1)       folded BN shift (f32)
    # o_ref:     (tile_co, tile_s)  lane-dense output tile
    x = x_ref[...].astype(w_ref.dtype)            # in-kernel cast (VPU, free slots)
    y = jnp.dot(w_ref[...], x, preferred_element_type=jnp.float32)
    o_ref[...] = jnp.maximum(y + shift_ref[...], 0.0).astype(o_ref.dtype)


def _conv1x1_bn_relu_kernel_multi_k(w_ref, x_ref, shift_ref, o_ref, acc_ref):
    # Same as above but with a Cin-tiled reduction; f32 VMEM accumulator.
    k = pl.program_id(3)

    @pl.when(k == 0)
    def _():
        acc_ref[...] = jnp.zeros_like(acc_ref)

    acc_ref[...] += jnp.dot(w_ref[...], x_ref[...].astype(w_ref.dtype),
                            preferred_element_type=jnp.float32)

    @pl.when(k == pl.num_programs(3) - 1)
    def _():
        y = acc_ref[...] + shift_ref[...]
        o_ref[...] = jnp.maximum(y, 0.0).astype(o_ref.dtype)


# --------------------------- wrapper ----------------------------------------

def conv1x1_bn_relu(x_nchw, weight, gamma, beta, running_mean, running_var, *,
                    compute_dtype=jnp.bfloat16, out_dtype=None,
                    max_tile_s=2048, max_tile_ci=512, max_tile_co=512):
    """Fused 1x1 conv (no bias) + BatchNorm2d (eval mode) + ReLU. NCHW in/out.

    x_nchw: (N, Cin, H, W); weight: (Cout, Cin, 1, 1) (PyTorch Conv2d layout).
    out_dtype=None keeps the input dtype (module semantics); pass jnp.bfloat16
    to halve the output HBM writeback when the consumer accepts it.
    """
    N, Cin, H, W = x_nchw.shape
    Cout = weight.shape[0]
    HW = H * W
    if out_dtype is None:
        out_dtype = x_nchw.dtype

    # ---- Fold BN (inference semantics) into weight scale + channel shift ----
    scale = gamma / jnp.sqrt(running_var + BN_EPS)             # (Cout,)
    shift = beta - running_mean * scale                        # (Cout,)
    w_mat = weight.reshape(Cout, Cin) * scale[:, None]         # (Cout, Cin) f32

    # ---- Channel tiles (full-dim blocks when they fit) ----
    if Cin <= max_tile_ci:
        tile_ci, cin_p = Cin, Cin
    else:
        tile_ci = max_tile_ci                                  # multiple of 128
        cin_p = _round_up(Cin, tile_ci)
    if Cout <= max_tile_co:
        tile_co, cout_p = Cout, Cout
    else:
        tile_co = max_tile_co                                  # multiple of 8
        cout_p = _round_up(Cout, tile_co)

    # ---- Spatial tile: lane-dense, minimal padding waste, big for DMA amortization ----
    hw128 = _round_up(HW, 128)
    if hw128 <= max_tile_s:
        tile_s = hw128
    else:
        best = None
        for t in range(max_tile_s, 0, -128):                  # larger t on ties
            padded = _round_up(HW, t)
            if best is None or padded < best[0]:
                best = (padded, t)
        tile_s = best[1]
    hw_p = _round_up(HW, tile_s)

    # v7x: guarantee >= 2 trips on a parallel axis so both TensorCores work.
    if N == 1 and cout_p // tile_co == 1 and hw_p // tile_s < 2 and hw128 >= 256:
        tile_s = _round_up(hw128 // 2, 128)
        hw_p = _round_up(HW, tile_s)

    # ---- Free reshape (no transpose); pad only when required ----
    x_m = x_nchw.reshape(N, Cin, HW)
    if hw_p != HW or cin_p != Cin:
        x_m = jnp.pad(x_m, ((0, 0), (0, cin_p - Cin), (0, hw_p - HW)))
    if cin_p != Cin or cout_p != Cout:
        w_mat = jnp.pad(w_mat, ((0, cout_p - Cout), (0, cin_p - Cin)))
        shift = jnp.pad(shift, (0, cout_p - Cout))
    shift2d = shift.reshape(cout_p, 1).astype(jnp.float32)

    # Weight is tiny -> pre-cast (exact f32 BN fold, then one cheap cast).
    # Activations stay in their original dtype and are cast inside the kernel.
    w_mat = w_mat.astype(compute_dtype)

    n_ci = cin_p // tile_ci

    # ---- Explicit VMEM working-set budget (double-buffered tiles + acc) ----
    x_bytes = jnp.dtype(x_m.dtype).itemsize
    w_bytes = jnp.dtype(compute_dtype).itemsize
    o_bytes = jnp.dtype(out_dtype).itemsize
    working = 2 * (tile_co * tile_ci * w_bytes
                   + tile_ci * tile_s * x_bytes
                   + tile_co * 4
                   + tile_co * tile_s * o_bytes)
    if n_ci > 1:
        working += tile_co * tile_s * 4                        # acc scratch
    vmem_limit_bytes = min(working + (16 << 20), 56 << 20)     # safe on v7x 64 MiB

    if n_ci == 1:
        # Fast path: single K block, no accumulator, no phase gating.
        grid = (N, hw_p // tile_s, cout_p // tile_co)
        grid_spec = pltpu.PrefetchScalarGridSpec(
            num_scalar_prefetch=0,
            grid=grid,
            in_specs=[
                pl.BlockSpec((tile_co, tile_ci), lambda n, s, co: (co, 0)),
                # x block index does not depend on co -> stays resident in VMEM
                pl.BlockSpec((None, tile_ci, tile_s), lambda n, s, co: (n, 0, s)),
                pl.BlockSpec((tile_co, 1), lambda n, s, co: (co, 0)),
            ],
            out_specs=pl.BlockSpec((None, tile_co, tile_s),
                                   lambda n, s, co: (n, co, s)),
            scratch_shapes=[],
        )
        kernel = _conv1x1_bn_relu_kernel_single_k
        dims = ("parallel", "parallel", "parallel")
    else:
        # Reduction (Cin) innermost; Cout next so x tile is reused across co.
        grid = (N, hw_p // tile_s, cout_p // tile_co, n_ci)
        grid_spec = pltpu.PrefetchScalarGridSpec(
            num_scalar_prefetch=0,
            grid=grid,
            in_specs=[
                pl.BlockSpec((tile_co, tile_ci), lambda n, s, co, ci: (co, ci)),
                pl.BlockSpec((None, tile_ci, tile_s),
                             lambda n, s, co, ci: (n, ci, s)),
                pl.BlockSpec((tile_co, 1), lambda n, s, co, ci: (co, 0)),
            ],
            out_specs=pl.BlockSpec((None, tile_co, tile_s),
                                   lambda n, s, co, ci: (n, co, s)),
            scratch_shapes=[pltpu.VMEM((tile_co, tile_s), jnp.float32)],
        )
        kernel = _conv1x1_bn_relu_kernel_multi_k
        dims = ("parallel", "parallel", "parallel", "arbitrary")

    out_p = pl.pallas_call(
        kernel,
        out_shape=jax.ShapeDtypeStruct((N, cout_p, hw_p), out_dtype),
        grid_spec=grid_spec,
        compiler_params=pltpu.CompilerParams(
            dimension_semantics=dims,
            vmem_limit_bytes=vmem_limit_bytes,
        ),
    )(w_mat, x_m, shift2d)

    # Slice off padding (no-op when already aligned) and restore NCHW.
    return out_p[:, :Cout, :HW].reshape(N, Cout, H, W)


if __name__ == "__main__":
    key = jax.random.PRNGKey(0)
    kx, kw, kg, kb, km, kv = jax.random.split(key, 6)

    N, Cin, Cout, H, W = 2, 4, 8, 16, 16

    x = jax.random.normal(kx, (N, Cin, H, W), dtype=jnp.float32)
    weight = jax.random.normal(kw, (Cout, Cin, 1, 1), dtype=jnp.float32) * 0.1
    gamma = 1.0 + 0.1 * jax.random.normal(kg, (Cout,), dtype=jnp.float32)
    beta = 0.1 * jax.random.normal(kb, (Cout,), dtype=jnp.float32)
    running_mean = 0.1 * jax.random.normal(km, (Cout,), dtype=jnp.float32)
    running_var = jnp.abs(jax.random.normal(kv, (Cout,), dtype=jnp.float32)) + 0.5

    out = conv1x1_bn_relu(x, weight, gamma, beta, running_mean, running_var)
    out = jax.block_until_ready(out)
    assert out.shape == (N, Cout, H, W)

    # Pure-JAX reference (same BN folding; emulate the kernel's bf16 MXU feed,
    # accumulation is f32 in both).
    scale = gamma / jnp.sqrt(running_var + BN_EPS)
    shift = beta - running_mean * scale
    w_scaled = weight.reshape(Cout, Cin) * scale[:, None]
    w_bf = w_scaled.astype(jnp.bfloat16).astype(jnp.float32)
    x_bf = x.astype(jnp.bfloat16).astype(jnp.float32)
    ref = jnp.maximum(jnp.einsum("oc,nchw->nohw", w_bf, x_bf)
                      + shift[None, :, None, None], 0.0)
    assert jnp.allclose(out, ref, atol=1e-3, rtol=1e-3)

    # Sanity check against the full-f32 reference (bf16 rounding tolerance).
    ref_f32 = jnp.maximum(jnp.einsum("oc,nchw->nohw", w_scaled, x)
                          + shift[None, :, None, None], 0.0)
    assert jnp.allclose(out, ref_f32, atol=5e-2, rtol=5e-2)

    print("KERNEL_OK")
</pallas_src>

<mosaic_0001>
module attributes {stable_mosaic.version = 11 : i64} {
  func.func @_conv1x1_bn_relu_kernel_single_k(%arg0: i32, %arg1: i32, %arg2: i32, %arg3: memref<8x4xbf16, #tpu.memory_space<vmem>>, %arg4: memref<1x4x256xf32, #tpu.memory_space<vmem>>, %arg5: memref<8x1xf32, #tpu.memory_space<vmem>>, %arg6: memref<1x8x256xf32, #tpu.memory_space<vmem>>) attributes {dimension_semantics = [#tpu.dimension_semantics<parallel>, #tpu.dimension_semantics<parallel>, #tpu.dimension_semantics<parallel>], iteration_bounds = array<i64: 2, 1, 1>, scalar_prefetch = 0 : i64, scratch_operands = 0 : i64, tpu.core_type = #tpu.core_type<tc>, window_params = [{transform_indices = @transform_0, window_bounds = array<i64: 8, 4>}, {transform_indices = @transform_1, window_bounds = array<i64: 1, 4, 256>}, {transform_indices = @transform_2, window_bounds = array<i64: 8, 1>}, {transform_indices = @transform_3, window_bounds = array<i64: 1, 8, 256>}]} {
    %c0 = arith.constant 0 : index
    %c0_0 = arith.constant 0 : index
    %c0_1 = arith.constant 0 : index
    %0 = vector.load %arg4[%c0, %c0_0, %c0_1] : memref<1x4x256xf32, #tpu.memory_space<vmem>>, vector<1x4x256xf32>
    %1 = vector.shape_cast %0 : vector<1x4x256xf32> to vector<4x256xf32>
    %2 = arith.truncf %1 : vector<4x256xf32> to vector<4x256xbf16>
    %c0_2 = arith.constant 0 : index
    %c0_3 = arith.constant 0 : index
    %3 = vector.load %arg3[%c0_2, %c0_3] : memref<8x4xbf16, #tpu.memory_space<vmem>>, vector<8x4xbf16>
    %cst = arith.constant dense<0.000000e+00> : vector<8x256xf32>
    %4 = tpu.matmul %3, %2, %cst {dimension_numbers = #tpu.dot_dimension_numbers<[1], [0], [0], [1], [0, 0, 1, 1], [], []>} : vector<8x4xbf16>, vector<4x256xbf16>, vector<8x256xf32> -> vector<8x256xf32>
    %c0_4 = arith.constant 0 : index
    %c0_5 = arith.constant 0 : index
    %5 = vector.load %arg5[%c0_4, %c0_5] : memref<8x1xf32, #tpu.memory_space<vmem>>, vector<8x1xf32>
    %6 = vector.broadcast %5 : vector<8x1xf32> to vector<8x256xf32>
    %7 = arith.addf %4, %6 : vector<8x256xf32>
    %cst_6 = arith.constant 0.000000e+00 : f32
    %8 = vector.broadcast %cst_6 : f32 to vector<8x256xf32>
    %9 = arith.maximumf %7, %8 : vector<8x256xf32>
    %c0_7 = arith.constant 0 : index
    %c0_8 = arith.constant 0 : index
    %c0_9 = arith.constant 0 : index
    %10 = vector.load %arg6[%c0_7, %c0_8, %c0_9] : memref<1x8x256xf32, #tpu.memory_space<vmem>>, vector<1x8x256xf32>
    %11 = vector.shape_cast %10 : vector<1x8x256xf32> to vector<8x256xf32>
    %12 = vector.shape_cast %9 : vector<8x256xf32> to vector<1x8x256xf32>
    tpu.vector_store %arg6[%c0_7, %c0_8, %c0_9], %12 {strides = array<i32>} : memref<1x8x256xf32, #tpu.memory_space<vmem>>, vector<1x8x256xf32>,
    return
  }
  func.func @transform_0(%arg0: i32, %arg1: i32, %arg2: i32) -> (i32, i32) {
    %c0_i32 = arith.constant 0 : i32
    %c0_i32_0 = arith.constant 0 : i32
    return %arg2, %c0_i32 : i32, i32
  }
  func.func @transform_1(%arg0: i32, %arg1: i32, %arg2: i32) -> (i32, i32, i32) {
    %c0_i32 = arith.constant 0 : i32
    %c0_i32_0 = arith.constant 0 : i32
    return %arg0, %c0_i32, %arg1 : i32, i32, i32
  }
  func.func @transform_2(%arg0: i32, %arg1: i32, %arg2: i32) -> (i32, i32) {
    %c0_i32 = arith.constant 0 : i32
    %c0_i32_0 = arith.constant 0 : i32
    return %arg2, %c0_i32 : i32, i32
  }
  func.func @transform_3(%arg0: i32, %arg1: i32, %arg2: i32) -> (i32, i32, i32) {
    %c0_i32 = arith.constant 0 : i32
    return %arg0, %arg2, %arg1 : i32, i32, i32
  }
}

</mosaic_0001>

<llo_original>
// kernel: tpu_custom_call.1
$region0: #{tpu_custom_call.1}
  #allocation0 [shape = 'u32[]', space=smem, size = 0x4, offset = 0x4, fixed_abs, tag = 'smem constant byte address 0x4 - core index']
  #allocation1 [shape = 'u32[144,128]{1,0:T(1,128)}', space=vmem, size = 0x12000, scoped, tag = 'internal scratch']
  %s0 = inlined_call_operand.vmem [shape: bf16[8,4], index: 0, kind: input, shape index: {}]
  %s1 = inlined_call_operand.vmem [shape: f32[2,4,256], index: 1, kind: input, shape index: {}]
  %s2 = inlined_call_operand.vmem [shape: f32[8,1], index: 2, kind: input, shape index: {}]
  %s3 = inlined_call_operand.hbm [shape: f32[2,8,256], index: 3, kind: output, shape index: {}]
  %s4 = sld [smem:[#allocation0]]
  $region45: #{tpu_custom_call.1} parent=0
    _
  %s6 = ssub.s32 1, %s4
  %s7 = scalar_select 0, %s6, %s4
  $region1: #{tpu_custom_call.1} parent=0
    #allocation2 [shape = 'u8[16384]{0}', space=vmem, size = 0x4000, scoped, tag = 'output window, operand 0']
    #allocation3 [shape = 's32[2]{0}', space=sflag, size = 0x8, scoped, tag = 'scoped memory for tpu_custom_call.1']
    %8 = vsyncpa [#allocation3], 0
    %s9 = scalar_lea.sflag [#allocation3], 1
    %10 = vsyncpa %s9, 0
    loop: start=0, step=1, limit=4
    $region2: #{tpu_custom_call.1} parent=1 // loop_pre_header
      _
    $region3: #{tpu_custom_call.1} parent=1 // loop_header
      %s12 = sphi 0, %s16
      %p13 = scmp.ge.s32.totalorder %s12, 4
      %s19 = sphi 0, %s38
      %s20 = sphi 0, %s34
      %s21 = sphi 0, %s30
      %s22 = sphi 0, %s19
      %s23 = sphi 0, %s20
      %s24 = sphi 0, %s21
      %s25 = sphi 0, %s22
      %s26 = sphi 0, %s23
      %s27 = sphi 0, %s24
      %s41 = sphi 0, %s43
      %s44 = sphi 0, %s41
      %s45 = sphi 0, %s44
      %s61 = sphi 0, %s45
      %s69 = sphi 0, %s71
      %s72 = sphi 0, %s69
      %s73 = sphi 0, %s72
      %s89 = sphi 0, %s73
      %s95 = sphi 0, %s97
      %s98 = sphi 0, %s95
      %s99 = sphi 0, %s98
      %s115 = sphi 0, %s99
      %s125 = sphi 0, %s127
      %s128 = sphi 0, %s125
      %s129 = sphi 0, %s128
      %s145 = sphi 0, %s129
    $region4: #{tpu_custom_call.1} parent=1 // loop_header_branch
      %15 = sbr.rel (%p13) target = $region8
    $region5: #{tpu_custom_call.1} parent=1 // loop_body
      %s17 = ssub.s32 %s12, 1
      %s18 = ssub.s32 %s12, 2
      %s28 = sadd.s32 1, %s21
      %p29 = scmp.ge.s32.totalorder %s28, 1
      %s30 = scalar_select %p29, 0, %s28
      %s31 = sadd.s32 1, %s20
      %s32 = scalar_select %p29, %s31, %s20
      %p33 = scmp.ge.s32.totalorder %s32, 1
      %s34 = scalar_select %p33, 0, %s32
      %s35 = sadd.s32 1, %s19
      %s36 = scalar_select %p33, %s35, %s19
      %p37 = scmp.ge.s32.totalorder %s36, 2
      %s38 = scalar_select %p37, 0, %s36
      %s39 = ssub.s32 %s21, %s30
      %p40 = scmp.eq.s32.totalorder %s39, 0
      %s42 = sadd.s32 %s41, 1
      %s43 = scalar_select %p40, %s41, %s42
      %p46 = pneg %p40
      %p47 = scmp.eq.s32.totalorder %s12, 1
      %p48 = por %p46, %p47
      %p49 = scmp.ne.s32.totalorder %s41, %s44
      %p50 = scmp.eq.s32.totalorder %s12, 0
      %p51 = por %p49, %p50
      %p52 = scmp.ne.s32.totalorder %s41, %s44
      %p53 = scmp.eq.s32.totalorder %s17, 1
      %p54 = por %p52, %p53
      %p55 = scmp.ne.s32.totalorder %s44, %s45
      %p56 = scmp.eq.s32.totalorder %s17, 0
      %p57 = por %p55, %p56
      %p58 = scmp.ne.s32.totalorder %s44, %s45
      %p59 = scmp.eq.s32.totalorder %s18, 1
      %p60 = por %p58, %p59
      %p62 = scmp.ne.s32.totalorder %s45, %s61
      %p63 = scmp.eq.s32.totalorder %s18, 0
      %p64 = por %p62, %p63
      %s65 = ssub.s32 %s19, %s38
      %s66 = ssub.s32 %s20, %s34
      %s67 = sor.u32 %s65, %s66
      %p68 = scmp.eq.s32.totalorder %s67, 0
      %s70 = sadd.s32 %s69, 1
      %s71 = scalar_select %p68, %s69, %s70
      %p74 = pneg %p68
      %p75 = scmp.eq.s32.totalorder %s12, 1
      %p76 = por %p74, %p75
      %p77 = scmp.ne.s32.totalorder %s69, %s72
      %p78 = scmp.eq.s32.totalorder %s12, 0
      %p79 = por %p77, %p78
      %p80 = scmp.ne.s32.totalorder %s69, %s72
      %p81 = scmp.eq.s32.totalorder %s17, 1
      %p82 = por %p80, %p81
      %p83 = scmp.ne.s32.totalorder %s72, %s73
      %p84 = scmp.eq.s32.totalorder %s17, 0
      %p85 = por %p83, %p84
      %p86 = scmp.ne.s32.totalorder %s72, %s73
      %p87 = scmp.eq.s32.totalorder %s18, 1
      %p88 = por %p86, %p87
      %p90 = scmp.ne.s32.totalorder %s73, %s89
      %p91 = scmp.eq.s32.totalorder %s18, 0
      %p92 = por %p90, %p91
      %s93 = ssub.s32 %s21, %s30
      %p94 = scmp.eq.s32.totalorder %s93, 0
      %s96 = sadd.s32 %s95, 1
      %s97 = scalar_select %p94, %s95, %s96
      %p100 = pneg %p94
      %p101 = scmp.eq.s32.totalorder %s12, 1
      %p102 = por %p100, %p101
      %p103 = scmp.ne.s32.totalorder %s95, %s98
      %p104 = scmp.eq.s32.totalorder %s12, 0
      %p105 = por %p103, %p104
      %p106 = scmp.ne.s32.totalorder %s95, %s98
      %p107 = scmp.eq.s32.totalorder %s17, 1
      %p108 = por %p106, %p107
      %p109 = scmp.ne.s32.totalorder %s98, %s99
      %p110 = scmp.eq.s32.totalorder %s17, 0
      %p111 = por %p109, %p110
      %p112 = scmp.ne.s32.totalorder %s98, %s99
      %p113 = scmp.eq.s32.totalorder %s18, 1
      %p114 = por %p112, %p113
      %p116 = scmp.ne.s32.totalorder %s99, %s115
      %p117 = scmp.eq.s32.totalorder %s18, 0
      %p118 = por %p116, %p117
      %s119 = ssub.s32 %s19, %s38
      %s120 = ssub.s32 %s21, %s30
      %s121 = sor.u32 %s119, %s120
      %s122 = ssub.s32 %s20, %s34
      %s123 = sor.u32 %s121, %s122
      %p124 = scmp.eq.s32.totalorder %s123, 0
      %s126 = sadd.s32 %s125, 1
      %s127 = scalar_select %p124, %s125, %s126
      %p130 = pneg %p124
      %p131 = scmp.eq.s32.totalorder %s12, 1
      %p132 = por %p130, %p131
      %p133 = scmp.ne.s32.totalorder %s125, %s128
      %p134 = scmp.eq.s32.totalorder %s12, 0
      %p135 = por %p133, %p134
      %p136 = scmp.ne.s32.totalorder %s125, %s128
      %p137 = scmp.eq.s32.totalorder %s17, 1
      %p138 = por %p136, %p137
      %p139 = scmp.ne.s32.totalorder %s128, %s129
      %p140 = scmp.eq.s32.totalorder %s17, 0
      %p141 = por %p139, %p140
      %p142 = scmp.ne.s32.totalorder %s128, %s129
      %p143 = scmp.eq.s32.totalorder %s18, 1
      %p144 = por %p142, %p143
      %p146 = scmp.ne.s32.totalorder %s129, %s145
      %p147 = scmp.eq.s32.totalorder %s18, 0
      %p148 = por %p146, %p147
      %p149 = scmp.le.s32.totalorder 1, %s12
      %p150 = scmp.lt.s32.totalorder %s12, 3
      %p151 = pnand %p149, %p150
      %p152 = pneg %p151
      // Predicated region
      $region9: #{tpu_custom_call.1} parent=5 // pred_check
        _
      $region10: #{tpu_custom_call.1} parent=5 // pred_check_branch
        %154 = sbr.rel (%p151) target = $region12
      $region11: #{tpu_custom_call.1} parent=5 // pred_region
        %s155 = ssub.s32 %s12, 1
        // Predicated region
        $region13: #{tpu_custom_call.1} parent=11 // pred_check
          %p156 = pneg %p57
        $region14: #{tpu_custom_call.1} parent=11 // pred_check_branch
          %158 = sbr.rel (%p156) target = $region16
        $region15: #{tpu_custom_call.1} parent=11 // pred_region
          %p159 = scmp.lt.s32.totalorder %s24, 0
          %s160 = scalar_select %p159, %s24, 0
          %s161 = smul.addr %s160, 4
          %s162 = scalar_lea.vmem %s0, %s161
        $region16: #{tpu_custom_call.1} parent=11 // pred_fallthru
          _
        // Predicated region
        $region17: #{tpu_custom_call.1} parent=11 // pred_check
          %p163 = pneg %p111
        $region18: #{tpu_custom_call.1} parent=11 // pred_check_branch
          %165 = sbr.rel (%p163) target = $region20
        $region19: #{tpu_custom_call.1} parent=11 // pred_region
          %p166 = scmp.lt.s32.totalorder %s24, 0
          %s167 = scalar_select %p166, %s24, 0
          %s168 = smul.addr %s167, 8
          %s169 = scalar_lea.vmem %s2, %s168
        $region20: #{tpu_custom_call.1} parent=11 // pred_fallthru
          _
      $region12: #{tpu_custom_call.1} parent=5 // pred_fallthru
        _
      %p170 = scmp.lt.s32.totalorder %s12, 2
      // Predicated region
      $region21: #{tpu_custom_call.1} parent=5 // pred_check
        %p171 = pneg %p170
      $region22: #{tpu_custom_call.1} parent=5 // pred_check_branch
        %173 = sbr.rel (%p171) target = $region24
      $region23: #{tpu_custom_call.1} parent=5 // pred_region
        // Predicated region
        $region25: #{tpu_custom_call.1} parent=23 // pred_check
          %p174 = pneg %p79
        $region26: #{tpu_custom_call.1} parent=23 // pred_check_branch
          %176 = sbr.rel (%p174) target = $region28
        $region27: #{tpu_custom_call.1} parent=23 // pred_region
          %s177 = smul.u32 2, %s20
          %p178 = scmp.lt.s32.totalorder %s19, 1
          %s179 = scalar_select %p178, %s19, 1
          %p180 = scmp.lt.s32.totalorder %s177, 1
          %s181 = scalar_select %p180, %s177, 1
          %s182 = smul.addr %s179, 2
          %s183 = sadd.s32 %s181, %s182
          %s184 = smul.addr %s183, 4
          %s185 = scalar_lea.vmem %s1, %s184
          %s186 = smul.u32 2, %s20
        $region28: #{tpu_custom_call.1} parent=23 // pred_fallthru
          _
      $region24: #{tpu_custom_call.1} parent=5 // pred_fallthru
        _
      %p187 = scmp.le.s32.totalorder 1, %s12
      %p188 = scmp.lt.s32.totalorder %s12, 3
      %p189 = pnand %p187, %p188
      %p190 = pneg %p189
      // Predicated region
      $region29: #{tpu_custom_call.1} parent=5 // pred_check
        _
      $region30: #{tpu_custom_call.1} parent=5 // pred_check_branch
        %192 = sbr.rel (%p189) target = $region32
      $region31: #{tpu_custom_call.1} parent=5 // pred_region
        %s193 = ssub.s32 %s12, 1
        %p194 = scmp.lt.s32.totalorder %s24, 0
        %s195 = scalar_select %p194, %s24, 0
        %s196 = smul.addr %s195, 4
        %s197 = scalar_lea.vmem %s0, %s196
        %p198 = pneg %p57
        %p199 = pneg %p54
        %s200 = smul.u32 2, %s23
        %p201 = scmp.lt.s32.totalorder %s22, 1
        %s202 = scalar_select %p201, %s22, 1
        %p203 = scmp.lt.s32.totalorder %s200, 1
        %s204 = scalar_select %p203, %s200, 1
        %s205 = smul.addr %s202, 2
        %s206 = sadd.s32 %s204, %s205
        %s207 = smul.addr %s206, 4
        %s208 = scalar_lea.vmem %s1, %s207
        %p209 = pneg %p85
        %p210 = pneg %p82
        %p211 = scmp.lt.s32.totalorder %s24, 0
        %s212 = scalar_select %p211, %s24, 0
        %s213 = smul.addr %s212, 8
        %s214 = scalar_lea.vmem %s2, %s213
        %p215 = pneg %p111
        %p216 = pneg %p108
        %p217 = pneg %p141
        %p218 = pneg %p138
        %s219 = sand.u32 %s128, 1
        %s220 = scalar_lea.sflag [#allocation3], %s219
        %s221 = sand.u32 %s128, 1
        %s222 = smul.addr %s221, 16
        %s223 = scalar_lea.vmem [#allocation2], %s222
        %p224 = scmp.lt.s32.totalorder %s24, 0
        %s225 = scalar_select %p224, %s24, 0
        %s226 = smul.addr %s225, 4
        %s227 = scalar_lea.vmem %s0, %s226
        %s228 = smul.u32 2, %s23
        %p229 = scmp.lt.s32.totalorder %s22, 1
        %s230 = scalar_select %p229, %s22, 1
        %p231 = scmp.lt.s32.totalorder %s228, 1
        %s232 = scalar_select %p231, %s228, 1
        %s233 = smul.addr %s230, 2
        %s234 = sadd.s32 %s232, %s233
        %s235 = smul.addr %s234, 4
        %s236 = scalar_lea.vmem %s1, %s235
        %s237 = smul.u32 2, %s23
        %p238 = scmp.lt.s32.totalorder %s24, 0
        %s239 = scalar_select %p238, %s24, 0
        %s240 = smul.addr %s239, 8
        %s241 = scalar_lea.vmem %s2, %s240
        %s242 = smul.u32 2, %s23
        %v244 = vld [vmem:[%s236] sm:$0xff]
        %v246 = vcombine.high %v244, %v244
        %v248 = vpack.c.bf16 %v244, %v244
        %v249 = vpack.c.bf16 %v246, %v246
        %v250 = vld [vmem:[%s227] sm:$0xf]
        %v251 = vld [vmem:[%s241] sm:$0xff]
        %253 = vset.pattern.permute.xlu0 0
        %254 = vperm.xlu0 %253, %v251
        %v255 = vpop.permute.xlu0 %254
        %vm257 = vcmask 31744
        %v259 = vsel %vm257, %v250, 0
        %vm261 = vcmask 1041408
        %v263 = vsel %vm261, %v248, 0
        %v266 = vsel %vm261, %v249, 0
        %268 = vmatprep.subr.bf16.mxu0 0
        %269 = vmatpush1.bf16.msra.mxu0 0
        %270 = vmatprep.subr.bf16.mxu0 0
        %271 = vmatpush1.bf16.msra.mxu0 0
        %272 = vmatprep.subr.bf16.mxu0 0
        %273 = vmatpush1.bf16.msra.mxu0 0
        %274 = vmatprep.subr.bf16.mxu0 0
        %275 = vmatpush1.bf16.msra.mxu0 0
        %276 = vmatprep.subr.bf16.mxu0 0
        %277 = vmatpush1.bf16.msra.mxu0 0
        %278 = vmatprep.subr.bf16.mxu0 0
        %279 = vmatpush1.bf16.msra.mxu0 0
        %280 = vmatprep.subr.bf16.mxu0 0
        %281 = vmatpush1.bf16.msra.mxu0 0
        %282 = vmatprep.subr.bf16.mxu0 %v266
        %283 = vmatpush1.bf16.msra.mxu0 %v263
        %284 = vmatprep.subr.bf16.mxu0 0
        %285 = vmatpush2.bf16.msra.mxu0 0
        %286 = vmatprep.subr.bf16.mxu0 0
        %287 = vmatpush2.bf16.msra.mxu0 0
        %288 = vmatprep.subr.bf16.mxu0 0
        %289 = vmatpush2.bf16.msra.mxu0 0
        %290 = vmatprep.subr.bf16.mxu0 0
        %291 = vmatpush2.bf16.msra.mxu0 0
        %292 = vmatprep.subr.bf16.mxu0 0
        %293 = vmatpush2.bf16.msra.mxu0 0
        %294 = vmatprep.subr.bf16.mxu0 0
        %295 = vmatpush2.bf16.msra.mxu0 0
        %296 = vmatprep.subr.bf16.mxu0 0
        %297 = vmatpush2.bf16.msra.mxu0 0
        %298 = vmatprep.subr.bf16.mxu0 0
        %299 = vmatpush2.bf16.msra.mxu0 0
        %300 = vmatprep.mubr.bf16.mxu0 0
        %301 = vmatmul.mubr.bf16.gmra.mxu0 %v259
        %v302 = vpop.f32.mrf.mxu0
        %v303 = vadd.f32 %v255, %v302
        %v304 = vpop.f32.mrf.mxu0
        %v305 = vadd.f32 %v255, %v304
        %v306 = vpop.f32.mrf.mxu0
        %v307 = vpop.f32.mrf.mxu0
        %308 = vdwg.mxu0
        %v309 = vmax.f32 %v303, 0.0
        %v310 = vmax.f32 %v305, 0.0
        %311 = vst [vmem:[%s223] sm:$0xff] %v309
        %312 = vst [vmem:[%s223 + $0x8] sm:$0xff] %v310
        %s313 = sand.u32 %s128, 1
        %s314 = scalar_lea.sflag [#allocation3], %s313
        %s315 = sand.u32 %s128, 1
        %s316 = smul.addr %s315, 16
        %s317 = scalar_lea.vmem [#allocation2], %s316
        // Predicated region
        $region33: #{tpu_custom_call.1} parent=31 // pred_check
          %p318 = pneg %p138
        $region34: #{tpu_custom_call.1} parent=31 // pred_check_branch
          %320 = sbr.rel (%p318) target = $region36
        $region35: #{tpu_custom_call.1} parent=31 // pred_region
          %s321 = smul.u32 2, %s23
          %s323 = ssub.s32 256, 256
          %324 = vsyncadd %s314, %s323
          %s325 = smul.addr %s24, 2
          %s326 = sadd.s32 %s321, %s325
          %s327 = smul.addr %s22, 2
          %s328 = sadd.s32 %s326, %s327
          %s329 = smul.addr %s328, 128
          %s330 = scalar_lea.hbm %s3, %s329
          %s332 = sshll.u32 %s317, 4
          %s333 = int_to_ptr.vmem [resolvable:$true] %s332
          %335 = dma.vmem_to_hbm [thread:$0]  %s333, 256, %s330, %s314
        $region36: #{tpu_custom_call.1} parent=31 // pred_fallthru
          _
      $region32: #{tpu_custom_call.1} parent=5 // pred_fallthru
        _
      %p336 = scmp.le.s32.totalorder 2, %s12
      // Predicated region
      $region37: #{tpu_custom_call.1} parent=5 // pred_check
        %p337 = pneg %p336
      $region38: #{tpu_custom_call.1} parent=5 // pred_check_branch
        %339 = sbr.rel (%p337) target = $region40
      $region39: #{tpu_custom_call.1} parent=5 // pred_region
        %s340 = ssub.s32 %s12, 2
        // Predicated region
        $region41: #{tpu_custom_call.1} parent=39 // pred_check
          %p341 = pneg %p144
        $region42: #{tpu_custom_call.1} parent=39 // pred_check_branch
          %343 = sbr.rel (%p341) target = $region44
        $region43: #{tpu_custom_call.1} parent=39 // pred_region
          %s344 = sand.u32 %s129, 1
          %s345 = scalar_lea.sflag [#allocation3], %s344
          %s346 = sand.u32 %s129, 1
          %s347 = smul.addr %s346, 16
          %s348 = scalar_lea.vmem [#allocation2], %s347
          %349 = dma.done %s345, 256
        $region44: #{tpu_custom_call.1} parent=39 // pred_fallthru
          _
      $region40: #{tpu_custom_call.1} parent=5 // pred_fallthru
        _
    $region6: #{tpu_custom_call.1} parent=1 // loop_footer
      %s16 = sadd.s32 1, %s12
    $region7: #{tpu_custom_call.1} parent=1 // loop_footer_branch
      %11 = sbr.rel target = $region3
    $region8: #{tpu_custom_call.1} parent=1 // loop_exit
      _
    %350 = vsyncpa [#allocation3], 1
    %s351 = scalar_lea.sflag [#allocation3], 1
    %352 = vsyncpa %s351, 1

</llo_original>
